<compile_context>
chip_gen: v7x
topology: tpu7x:2x2x1
jax: 0.10.0
libtpu: 0.0.40
codegen_flags: <defaults>
</compile_context>

<pallas_src>
import functools

import jax
import jax.numpy as jnp
from jax.experimental import pallas as pl
from jax.experimental.pallas import tpu as pltpu


def _round_up(x: int, m: int) -> int:
    return ((x + m - 1) // m) * m


def _sublane_multiple(dtype) -> int:
    itemsize = jnp.dtype(dtype).itemsize
    return {4: 8, 2: 16, 1: 32}.get(itemsize, 8)


def _focal_ce_sum_kernel(x_ref, t_ref, o_ref, *, n: int, tm: int, steps: int,
                         needs_mask: bool, first_masked_tile: int):
    """Accumulate the cross-entropy sum of one (tm, C) logits tile into the
    shard's resident (8, 128) partial-sum block."""
    i = pl.program_id(0)          # batch shard (parallel)
    j = pl.program_id(1)          # reduction step within the shard (arbitrary)

    # Zero the shard accumulator on its first reduction step.  The output block
    # index only depends on `i`, so it stays resident in VMEM across `j` and is
    # written back to HBM once per shard.
    @pl.when(j == 0)
    def _init():
        o_ref[...] = jnp.zeros_like(o_ref)

    x = x_ref[...].astype(jnp.float32)     # (tm, C); in-kernel upcast (bf16 on the wire)
    t = t_ref[...]                         # (tm, 1) int32 targets

    # Numerically stable log-sum-exp; reuse (x - m) for the target gather so the
    # steady-state elementwise work stays minimal.
    m = jnp.max(x, axis=-1, keepdims=True)                                   # (tm, 1)
    xm = x - m                                                               # (tm, C)
    lse_rel = jnp.log(jnp.sum(jnp.exp(xm), axis=-1, keepdims=True))          # (tm, 1) = lse - m

    class_ids = jax.lax.broadcasted_iota(jnp.int32, x.shape, 1)              # (tm, C)
    tgt_rel = jnp.sum(jnp.where(class_ids == t, xm, 0.0),
                      axis=-1, keepdims=True)                                # (tm, 1) = x[t] - m

    per_sample_ce = lse_rel - tgt_rel                                        # (tm, 1)

    lin = i * steps + j                    # un-clamped linear tile index

    if needs_mask:
        # Padding exists (ragged last tile and/or duplicated clamped tile).
        # Only the padded tiles pay for the row mask; full tiles take the fast path.
        @pl.when(lin < first_masked_tile)
        def _acc_full():
            o_ref[...] += jnp.sum(per_sample_ce)

        @pl.when(lin >= first_masked_tile)
        def _acc_masked():
            rows = lin * tm + jax.lax.broadcasted_iota(jnp.int32, (tm, 1), 0)
            o_ref[...] += jnp.sum(jnp.where(rows < n, per_sample_ce, 0.0))
    else:
        o_ref[...] += jnp.sum(per_sample_ce)


# Total VMEM pipeline budget used for tile sizing (double-buffered native logits
# + f32 upcast temporaries + lane-padded targets).  Kept <= ~40 MiB so the
# 48 MiB vmem_limit below is safe on every generation (v7x has 64 MiB physical).
_VMEM_TILE_BUDGET = 32 * 1024 * 1024
_VMEM_LIMIT_CAP = 48 * 1024 * 1024


def focal_loss(inputs: jax.Array, targets: jax.Array, gamma: float = 2.0,
               tile_rows=None) -> jax.Array:
    """Pallas TPU implementation of FocalLoss.forward.

    Args:
      inputs: (N, C) float logits (any float dtype; upcast to f32 in-kernel).
      targets: (N,) integer class indices in [0, C).  (No ignore_index support.)
      gamma: focusing parameter (static).
      tile_rows: optional override for the row-tile size.

    Returns:
      Scalar float32 focal loss.
    """
    n, c = inputs.shape
    t2 = targets.astype(jnp.int32).reshape(n, 1)

    itemsize = jnp.dtype(inputs.dtype).itemsize
    sub = _sublane_multiple(inputs.dtype)
    c_pad = _round_up(c, 128)              # lanes pad to 128 in VMEM

    if tile_rows is None:
        # Real per-row VMEM cost of one pipeline stage:
        #   2x double-buffered native logits rows
        # + ~3x f32-sized upcast temporaries (xm, exp, select)
        # + 2x lane-padded (tm, 1)->(tm, 128) int32 targets rows.
        per_row_bytes = 2 * c_pad * itemsize + 3 * c_pad * 4 + 2 * 128 * 4
        tile_rows = max(sub, _VMEM_TILE_BUDGET // per_row_bytes)

    tm = max(sub, (int(tile_rows) // sub) * sub)     # dtype-correct sublane multiple
    tm = min(tm, _round_up(n, sub))                  # never bigger than the (padded) batch

    num_tiles = pl.cdiv(n, tm)
    shards = 2 if num_tiles >= 2 else 1              # feeds both v7x TCs; harmless elsewhere
    steps = pl.cdiv(num_tiles, shards)
    last_tile = num_tiles - 1

    needs_mask = (shards * steps * tm != n)          # any padded / duplicated rows?
    first_masked_tile = n // tm                      # first tile containing padded rows

    def row_map(i, j):
        # Clamp duplicated tiles (odd tile count split over 2 shards) onto the
        # last real tile; their rows are masked out by the row-index check.
        return (jnp.minimum(i * steps + j, last_tile), 0)

    # VMEM ceiling: measured footprint + slack, capped for v7x's 64 MiB physical VMEM.
    vmem_est = (2 * tm * c_pad * itemsize            # double-buffered native logits
                + 4 * tm * c_pad * 4                 # f32 temporaries (+ slack)
                + 2 * tm * 128 * 4                   # lane-padded targets, double-buffered
                + 2 * 8 * 128 * 4)                   # output block
    vmem_limit = int(min(max(vmem_est + (4 << 20), 32 << 20), _VMEM_LIMIT_CAP))

    cost = pl.CostEstimate(
        flops=7 * n * c,                                     # max/sub/exp/sum/select passes
        transcendentals=n * c + n,                           # exp over tiles + per-row log
        bytes_accessed=n * c * itemsize + n * 4 + shards * 8 * 128 * 4,
    )

    partials = pl.pallas_call(
        functools.partial(_focal_ce_sum_kernel, n=n, tm=tm, steps=steps,
                          needs_mask=needs_mask,
                          first_masked_tile=first_masked_tile),
        out_shape=jax.ShapeDtypeStruct((8 * shards, 128), jnp.float32),
        grid=(shards, steps),
        in_specs=[
            pl.BlockSpec((tm, c), row_map),          # logits row-tile (native dtype)
            pl.BlockSpec((tm, 1), row_map),          # matching targets rows
        ],
        out_specs=pl.BlockSpec((8, 128), lambda i, j: (i, 0)),
        compiler_params=pltpu.CompilerParams(
            dimension_semantics=("parallel", "arbitrary"),
            vmem_limit_bytes=vmem_limit,
        ),
        cost_estimate=cost,
    )(inputs, t2)

    # Epilogue in the wrapper (3 scalar ops): mean CE + focal transform.
    ce = jnp.sum(partials[::8, 0]) * jnp.float32(1.0 / n)
    pt = jnp.exp(-ce)
    return (1.0 - pt) ** jnp.float32(gamma) * ce


def _reference_focal_loss(inputs, targets, gamma=2.0):
    # Pure-JAX reference matching torch.nn.CrossEntropyLoss + focal transform.
    logp = jax.nn.log_softmax(inputs.astype(jnp.float32), axis=-1)
    n = inputs.shape[0]
    ce = -jnp.mean(logp[jnp.arange(n), targets])
    pt = jnp.exp(-ce)
    return (1.0 - pt) ** gamma * ce


if __name__ == "__main__":
    key = jax.random.PRNGKey(0)
    k_x, k_t = jax.random.split(key)

    # 1) Small single-tile path (classification-head sized shapes).
    batch, num_classes = 8, 32
    inputs = jax.random.normal(k_x, (batch, num_classes), dtype=jnp.float32)
    targets = jax.random.randint(k_t, (batch,), 0, num_classes, dtype=jnp.int32)
    loss = focal_loss(inputs, targets, gamma=2.0)
    jax.block_until_ready(loss)
    ref = _reference_focal_loss(inputs, targets, gamma=2.0)
    assert jnp.allclose(loss, ref, atol=1e-5, rtol=1e-5), (loss, ref)

    # 2) Multi-tile path with a ragged last tile and an odd tile count split over
    #    2 parallel shards: exercises the shard accumulator, pl.when init, the
    #    block-index clamp and the row masking.
    k_x2, k_t2 = jax.random.split(jax.random.PRNGKey(0))
    batch2 = 40
    inputs2 = jax.random.normal(k_x2, (batch2, num_classes), dtype=jnp.float32)
    targets2 = jax.random.randint(k_t2, (batch2,), 0, num_classes, dtype=jnp.int32)
    loss2 = focal_loss(inputs2, targets2, gamma=2.0, tile_rows=16)
    jax.block_until_ready(loss2)
    ref2 = _reference_focal_loss(inputs2, targets2, gamma=2.0)
    assert jnp.allclose(loss2, ref2, atol=1e-5, rtol=1e-5), (loss2, ref2)

    # 3) bf16 logits on the wire (in-kernel f32 upcast, 16-row sublane rounding).
    k_x3, k_t3 = jax.random.split(jax.random.PRNGKey(1))
    batch3 = 48
    inputs3 = jax.random.normal(k_x3, (batch3, num_classes), dtype=jnp.bfloat16)
    targets3 = jax.random.randint(k_t3, (batch3,), 0, num_classes, dtype=jnp.int32)
    loss3 = focal_loss(inputs3, targets3, gamma=2.0)
    jax.block_until_ready(loss3)
    ref3 = _reference_focal_loss(inputs3, targets3, gamma=2.0)
    assert jnp.allclose(loss3, ref3, atol=1e-4, rtol=1e-4), (loss3, ref3)

    print("KERNEL_OK")
</pallas_src>

<mosaic_0001>
module attributes {stable_mosaic.version = 11 : i64} {
  func.func @_focal_ce_sum_kernel(%arg0: i32, %arg1: i32, %arg2: memref<8x32xf32, #tpu.memory_space<vmem>>, %arg3: memref<8x1xi32, #tpu.memory_space<vmem>>, %arg4: memref<8x128xf32, #tpu.memory_space<vmem>>) attributes {dimension_semantics = [#tpu.dimension_semantics<parallel>, #tpu.dimension_semantics<arbitrary>], iteration_bounds = array<i64: 1, 1>, scalar_prefetch = 0 : i64, scratch_operands = 0 : i64, tpu.core_type = #tpu.core_type<tc>, window_params = [{transform_indices = @transform_0, window_bounds = array<i64: 8, 32>}, {transform_indices = @transform_1, window_bounds = array<i64: 8, 1>}, {transform_indices = @transform_2, window_bounds = array<i64: 8, 128>}]} {
    %c0_i32 = arith.constant 0 : i32
    %0 = arith.cmpi eq, %arg1, %c0_i32 : i32
    %1 = arith.extui %0 : i1 to i32
    %c0_i32_0 = arith.constant 0 : i32
    %2 = arith.cmpi ne, %1, %c0_i32_0 : i32
    scf.if %2 {
      %cst_12 = arith.constant 0.000000e+00 : f32
      %29 = vector.broadcast %cst_12 : f32 to vector<8x128xf32>
      %c0_13 = arith.constant 0 : index
      %c0_14 = arith.constant 0 : index
      %30 = vector.load %arg4[%c0_13, %c0_14] : memref<8x128xf32, #tpu.memory_space<vmem>>, vector<8x128xf32>
      tpu.vector_store %arg4[%c0_13, %c0_14], %29 {strides = array<i32>} : memref<8x128xf32, #tpu.memory_space<vmem>>, vector<8x128xf32>,
    } else {
    }
    %c0 = arith.constant 0 : index
    %c0_1 = arith.constant 0 : index
    %3 = vector.load %arg2[%c0, %c0_1] : memref<8x32xf32, #tpu.memory_space<vmem>>, vector<8x32xf32>
    %c0_2 = arith.constant 0 : index
    %c0_3 = arith.constant 0 : index
    %4 = vector.load %arg3[%c0_2, %c0_3] : memref<8x1xi32, #tpu.memory_space<vmem>>, vector<8x1xi32>
    %cst = arith.constant dense<0xFF800000> : vector<8xf32>
    %5 = vector.multi_reduction <maximumf>, %3, %cst [1] : vector<8x32xf32> to vector<8xf32>
    %6 = vector.shape_cast %5 : vector<8xf32> to vector<8x1xf32>
    %7 = vector.broadcast %6 : vector<8x1xf32> to vector<8x32xf32>
    %8 = arith.subf %3, %7 : vector<8x32xf32>
    %9 = math.exp %8 : vector<8x32xf32>
    %cst_4 = arith.constant dense<0.000000e+00> : vector<8xf32>
    %10 = vector.multi_reduction <add>, %9, %cst_4 [1] : vector<8x32xf32> to vector<8xf32>
    %11 = vector.shape_cast %10 : vector<8xf32> to vector<8x1xf32>
    %12 = math.log %11 : vector<8x1xf32>
    %13 = tpu.iota {dimensions = array<i32: 1>} : vector<8x32xi32>
    %14 = vector.broadcast %4 : vector<8x1xi32> to vector<8x32xi32>
    %15 = arith.cmpi eq, %13, %14 : vector<8x32xi32>
    %cst_5 = arith.constant 0.000000e+00 : f32
    %16 = vector.broadcast %cst_5 : f32 to vector<8x32xf32>
    %17 = arith.select %15, %8, %16 : vector<8x32xi1>, vector<8x32xf32>
    %cst_6 = arith.constant dense<0.000000e+00> : vector<8xf32>
    %18 = vector.multi_reduction <add>, %17, %cst_6 [1] : vector<8x32xf32> to vector<8xf32>
    %19 = vector.shape_cast %18 : vector<8xf32> to vector<8x1xf32>
    %20 = arith.subf %12, %19 : vector<8x1xf32>
    %c0_7 = arith.constant 0 : index
    %c0_8 = arith.constant 0 : index
    %21 = vector.load %arg4[%c0_7, %c0_8] : memref<8x128xf32, #tpu.memory_space<vmem>>, vector<8x128xf32>
    %22 = vector.shape_cast %20 : vector<8x1xf32> to vector<1x8x1xf32>
    %cst_9 = arith.constant dense<0.000000e+00> : vector<1xf32>
    %23 = vector.multi_reduction <add>, %22, %cst_9 [1, 2] : vector<1x8x1xf32> to vector<1xf32>
    %24 = vector.shape_cast %23 : vector<1xf32> to vector<1x1x1xf32>
    %25 = vector.extract %24[0, 0, 0] : f32 from vector<1x1x1xf32>
    %26 = vector.broadcast %25 : f32 to vector<8x128xf32>
    %27 = arith.addf %21, %26 : vector<8x128xf32>
    %c0_10 = arith.constant 0 : index
    %c0_11 = arith.constant 0 : index
    %28 = vector.load %arg4[%c0_10, %c0_11] : memref<8x128xf32, #tpu.memory_space<vmem>>, vector<8x128xf32>
    tpu.vector_store %arg4[%c0_10, %c0_11], %27 {strides = array<i32>} : memref<8x128xf32, #tpu.memory_space<vmem>>, vector<8x128xf32>,
    return
  }
  func.func @transform_0(%arg0: i32, %arg1: i32) -> (i32, i32) {
    %c1_i32 = arith.constant 1 : i32
    %0 = arith.muli %arg0, %c1_i32 : i32
    %1 = arith.addi %0, %arg1 : i32
    %c0_i32 = arith.constant 0 : i32
    %2 = arith.minsi %1, %c0_i32 : i32
    %c0_i32_0 = arith.constant 0 : i32
    %c0_i32_1 = arith.constant 0 : i32
    return %2, %c0_i32_0 : i32, i32
  }
  func.func @transform_1(%arg0: i32, %arg1: i32) -> (i32, i32) {
    %c1_i32 = arith.constant 1 : i32
    %0 = arith.muli %arg0, %c1_i32 : i32
    %1 = arith.addi %0, %arg1 : i32
    %c0_i32 = arith.constant 0 : i32
    %2 = arith.minsi %1, %c0_i32 : i32
    %c0_i32_0 = arith.constant 0 : i32
    %c0_i32_1 = arith.constant 0 : i32
    return %2, %c0_i32_0 : i32, i32
  }
  func.func @transform_2(%arg0: i32, %arg1: i32) -> (i32, i32) {
    %c0_i32 = arith.constant 0 : i32
    %c0_i32_0 = arith.constant 0 : i32
    return %arg0, %c0_i32 : i32, i32
  }
}

</mosaic_0001>

<llo_original>
// kernel: tpu_custom_call.1
$region0: #{tpu_custom_call.1}
  #allocation0 [shape = 'u32[]', space=smem, size = 0x4, offset = 0x4, fixed_abs, tag = 'smem constant byte address 0x4 - core index']
  #allocation1 [shape = 'u32[144,128]{1,0:T(1,128)}', space=vmem, size = 0x12000, scoped, tag = 'internal scratch']
  %s0 = inlined_call_operand.vmem [shape: f32[8,32], index: 0, kind: input, shape index: {}]
  %s1 = inlined_call_operand.vmem [shape: s32[8,1], index: 1, kind: input, shape index: {}]
  %s2 = inlined_call_operand.hbm [shape: f32[8,128], index: 2, kind: output, shape index: {}]
  %s3 = sld [smem:[#allocation0]]
  $region22: #{tpu_custom_call.1} parent=0
    _
  %s5 = ssub.s32 1, %s3
  %s6 = scalar_select 0, %s5, %s3
  $region1: #{tpu_custom_call.1} parent=0
    #allocation2 [shape = 'u8[4096]{0}', space=vmem, size = 0x1000, scoped, tag = 'output window, operand 0, single buffered']
    #allocation3 [shape = 's32[1]{0}', space=sflag, size = 0x4, scoped, tag = 'scoped memory for tpu_custom_call.1']
    %7 = vsyncpa [#allocation3], 0
    // Predicated region
    $region2: #{tpu_custom_call.1} parent=1 // pred_check
      _
    $region3: #{tpu_custom_call.1} parent=1 // pred_check_branch
      %9 = sbr.rel (0) target = $region5
    $region4: #{tpu_custom_call.1} parent=1 // pred_region
      %s10 = sadd.s32 0, 0
      %p11 = scmp.lt.s32.totalorder %s10, 0
      %s12 = scalar_select %p11, %s10, 0
      %p13 = scmp.lt.s32.totalorder %s12, 0
      %s14 = scalar_select %p13, %s12, 0
      %s15 = smul.addr %s14, 8
      %s16 = scalar_lea.vmem %s0, %s15
      %s17 = sadd.s32 0, 0
      %p18 = scmp.lt.s32.totalorder %s17, 0
      %s19 = scalar_select %p18, %s17, 0
    $region5: #{tpu_custom_call.1} parent=1 // pred_fallthru
      _
    // Predicated region
    $region6: #{tpu_custom_call.1} parent=1 // pred_check
      _
    $region7: #{tpu_custom_call.1} parent=1 // pred_check_branch
      %21 = sbr.rel (0) target = $region9
    $region8: #{tpu_custom_call.1} parent=1 // pred_region
      %s22 = sadd.s32 0, 0
      %p23 = scmp.lt.s32.totalorder %s22, 0
      %s24 = scalar_select %p23, %s22, 0
      %p25 = scmp.lt.s32.totalorder %s24, 0
      %s26 = scalar_select %p25, %s24, 0
      %s27 = smul.addr %s26, 8
      %s28 = scalar_lea.vmem %s1, %s27
      %s29 = sadd.s32 0, 0
      %p30 = scmp.lt.s32.totalorder %s29, 0
      %s31 = scalar_select %p30, %s29, 0
    $region9: #{tpu_custom_call.1} parent=1 // pred_fallthru
      _
    %s32 = sadd.s32 0, 0
    %p33 = scmp.lt.s32.totalorder %s32, 0
    %s34 = scalar_select %p33, %s32, 0
    %p35 = scmp.lt.s32.totalorder %s34, 0
    %s36 = scalar_select %p35, %s34, 0
    %s37 = smul.addr %s36, 8
    %s38 = scalar_lea.vmem %s0, %s37
    %s39 = sadd.s32 0, 0
    %p40 = scmp.lt.s32.totalorder %s39, 0
    %s41 = scalar_select %p40, %s39, 0
    %p42 = scmp.lt.s32.totalorder %s41, 0
    %s43 = scalar_select %p42, %s41, 0
    %s44 = smul.addr %s43, 8
    %s45 = scalar_lea.vmem %s1, %s44
    %s46 = sadd.s32 0, 0
    %p47 = scmp.lt.s32.totalorder %s46, 0
    %s48 = scalar_select %p47, %s46, 0
    %p49 = scmp.lt.s32.totalorder %s48, 0
    %s50 = scalar_select %p49, %s48, 0
    %s51 = smul.addr %s50, 8
    %s52 = scalar_lea.vmem %s0, %s51
    %s53 = sadd.s32 0, 0
    %p54 = scmp.lt.s32.totalorder %s53, 0
    %s55 = scalar_select %p54, %s53, 0
    %s56 = sadd.s32 0, 0
    %p57 = scmp.lt.s32.totalorder %s56, 0
    %s58 = scalar_select %p57, %s56, 0
    %p59 = scmp.lt.s32.totalorder %s58, 0
    %s60 = scalar_select %p59, %s58, 0
    %s61 = smul.addr %s60, 8
    %s62 = scalar_lea.vmem %s1, %s61
    %s63 = sadd.s32 0, 0
    %p64 = scmp.lt.s32.totalorder %s63, 0
    %s65 = scalar_select %p64, %s63, 0
    %p66 = scmp.eq.s32.totalorder 0, 0
    // Predicated region
    $region10: #{tpu_custom_call.1} parent=1 // pred_check
      %p67 = pneg %p66
    $region11: #{tpu_custom_call.1} parent=1 // pred_check_branch
      %69 = sbr.rel (%p67) target = $region13
    $region12: #{tpu_custom_call.1} parent=1 // pred_region
      %70 = vst [vmem:[#allocation2] sm:$0xff] 0.0
    $region13: #{tpu_custom_call.1} parent=1 // pred_fallthru
      _
    %v71 = vld [vmem:[%s52] sm:$0xff]
    %v72 = vld [vmem:[%s62] sm:$0xff]
    %vm73 = vcmask 261120
    %v74 = vsel %vm73, %v71, -inf
    %75 = vmax.xlane.f32.xlu0 %v74
    %v76 = vpop.xlane.xlu0 %75
    %v77 = vsub.f32 %v71, %v76
    %v78 = vmul.f32 %v77, 1.442695
    %v79 = vpow.pop %v78
    %v80 = vsel %vm73, %v79, 0.0
    %81 = vadd.xlane.f32.xlu0 %v80
    %v82 = vpop.xlane.xlu0 %81
    %v83 = vlog2.pop %v82
    %v84 = vmul.f32 %v83, 0.6931472
    %v85 = vlaneseq
    %v86 = vand.u32 %v85, 127
    %87 = vset.pattern.permute.xlu0 0
    %88 = vperm.xlu0 %87, %v72
    %v89 = vpop.permute.xlu0 %88
    %vm90 = vcmp.eq.s32.totalorder %v86, %v89
    %v91 = vsel %vm90, %v77, 0.0
    %v92 = vsel %vm73, %v91, 0.0
    %93 = vadd.xlane.f32.xlu0 %v92
    %v94 = vpop.xlane.xlu0 %93
    %v95 = vsub.f32 %v84, %v94
    %v96 = vld [vmem:[#allocation2] sm:$0xff]
    %vm97 = vcmask 7168
    %v98 = vsel %vm97, %v95, 0.0
    %99 = vadd.xlane.f32.xlu0 %v98
    %v100 = vpop.xlane.xlu0 %99
    %v101 = vrot.slane %v100, 4
    %v102 = vadd.f32 %v100, %v101
    %v103 = vrot.slane %v102, 2
    %v104 = vadd.f32 %v102, %v103
    %v105 = vrot.slane %v104, 1
    %v106 = vadd.f32 %v104, %v105
    %s107 = vtos %v106
    %v108 = vstv %s107
    %v109 = vadd.f32 %v96, %v108
    %110 = vst [vmem:[#allocation2] sm:$0xff] %v109
    // Predicated region
    $region14: #{tpu_custom_call.1} parent=1 // pred_check
      _
    $region15: #{tpu_custom_call.1} parent=1 // pred_check_branch
      %112 = sbr.rel (0) target = $region17
    $region16: #{tpu_custom_call.1} parent=1 // pred_region
      %s114 = ssub.s32 128, 128
      %115 = vsyncadd [#allocation3], %s114
      %s117 = sshll.u32 [#allocation2], 4
      %s118 = int_to_ptr.vmem [resolvable:$true] %s117
      %120 = dma.vmem_to_hbm [thread:$0]  %s118, 128, %s2, [#allocation3]
    $region17: #{tpu_custom_call.1} parent=1 // pred_fallthru
      _
    // Predicated region
    $region18: #{tpu_custom_call.1} parent=1 // pred_check
      _
    $region19: #{tpu_custom_call.1} parent=1 // pred_check_branch
      %122 = sbr.rel (0) target = $region21
    $region20: #{tpu_custom_call.1} parent=1 // pred_region
      %123 = dma.done [#allocation3], 128
    $region21: #{tpu_custom_call.1} parent=1 // pred_fallthru
      _
    %124 = vsyncpa [#allocation3], 1

</llo_original>
